<compile_context>
chip_gen: v7x
topology: tpu7x:2x2x1
jax: 0.10.0
libtpu: 0.0.40
codegen_flags: <defaults>
</compile_context>

<pallas_src>
from functools import partial

import jax
import jax.numpy as jnp
from jax.experimental import pallas as pl
from jax.experimental.pallas import tpu as pltpu


def _attn_group_kernel(x_ref, wqkv_ref, bqkv_ref, wo_ref, bo_ref, o_ref,
                       xb_ref, acc_ref, *, group_size, head_dim):
    # x_ref:    (BB, N, dim_p)          batch block (resident across groups)
    # wqkv_ref: (ng, dim_p, 3*G*hd)     resident fused qkv weights (bf16)
    # bqkv_ref: (ng, 1, 3*G*hd)         resident fused qkv biases (f32)
    # wo_ref:   (ng, G*hd, dim_p)       resident fused output-proj weights (bf16)
    # bo_ref:   (1, dim_p)              output-proj bias (f32)
    # o_ref:    (BB, N, dim_p)          output block (written on last group)
    # xb_ref:   (BB*N, dim_p)           cached bf16 activations (scratch)
    # acc_ref:  (BB*N, dim_p)           f32 output accumulator (scratch)
    bb, n, dim_p = x_ref.shape
    G, hd = group_size, head_dim
    GH = G * hd
    g = pl.program_id(1)

    @pl.when(g == 0)
    def _():
        xb_ref[...] = x_ref[...].reshape(bb * n, dim_p).astype(jnp.bfloat16)
        acc_ref[...] = jnp.zeros_like(acc_ref)

    xb = xb_ref[...]                                          # (BB*N, dim_p) bf16

    # Fused per-group qkv projection: single MXU matmul of width 3*G*hd.
    # The attention scale is pre-folded into the Q columns (wrapper).
    qkv = jnp.dot(xb, wqkv_ref[g], preferred_element_type=jnp.float32)
    qkv = qkv + bqkv_ref[g]                                   # (BB*N, 3*GH) f32

    ctx_cols = []
    for t in range(G):                                        # static unroll, G small
        q = qkv[:, t * hd:(t + 1) * hd]
        k = qkv[:, GH + t * hd:GH + (t + 1) * hd]
        v = qkv[:, 2 * GH + t * hd:2 * GH + (t + 1) * hd]
        qb = q.reshape(bb, n, hd).astype(jnp.bfloat16)
        kb = k.reshape(bb, n, hd).astype(jnp.bfloat16)
        vb = v.reshape(bb, n, hd).astype(jnp.bfloat16)

        # Scores via leading-batch dot_general (no explicit k.T), f32 softmax.
        s = jnp.einsum('bqd,bkd->bqk', qb, kb,
                       preferred_element_type=jnp.float32)    # (BB, N, N)
        s = s - jnp.max(s, axis=-1, keepdims=True)
        p = jnp.exp(s)                                        # in [0,1], bf16-safe
        denom = jnp.sum(p, axis=-1, keepdims=True)            # (BB, N, 1)
        ctx = jnp.einsum('bqk,bkd->bqd', p.astype(jnp.bfloat16), vb,
                         preferred_element_type=jnp.float32)  # (BB, N, hd)
        # Normalize after PV: VPU multiply over hd lanes, EUP reciprocal.
        ctx = ctx * pl.reciprocal(denom, approx=True)
        ctx_cols.append(ctx.reshape(bb * n, hd))

    ctx_g = jnp.concatenate(ctx_cols, axis=-1).astype(jnp.bfloat16)   # (BB*N, GH)

    # Fused per-group output projection: contraction depth G*hd.
    acc_ref[...] += jnp.dot(ctx_g, wo_ref[g], preferred_element_type=jnp.float32)

    @pl.when(g == pl.num_programs(1) - 1)
    def _():
        out = acc_ref[...] + bo_ref[...]                      # (BB*N, dim_p)
        o_ref[...] = out.reshape(bb, n, dim_p).astype(o_ref.dtype)


def prepare_modified_attention_weights(qkv_w, qkv_b, proj_w, proj_b, *,
                                       num_heads, dim_scale, mxu_width=256):
    """One-time weight re-layout (hoist out of the per-call path / cache it)."""
    dim = proj_w.shape[0]
    assert qkv_w.shape == (3 * dim, dim)
    assert dim % num_heads == 0
    subset = int(dim * dim_scale)            # current_subset_dim (PyTorch int())
    h_sub = int(num_heads * dim_scale)       # number of sub-network heads
    hd = dim // num_heads                    # head_dim (fixed)
    assert h_sub >= 1 and h_sub * hd == subset, (
        "dim_scale must select a whole number of heads "
        f"(subset={subset}, heads*head_dim={h_sub * hd})")
    scale = float(hd) ** -0.5

    # Head-group size: largest divisor of h_sub with G*hd <= mxu_width.
    G = 1
    for cand in range(1, h_sub + 1):
        if h_sub % cand == 0 and cand * hd <= mxu_width:
            G = cand
    GH = G * hd
    ng = h_sub // G

    # Subnetwork slicing.  qkv_w rows: [0:dim]=q, [dim:2*dim]=k, [2*dim:3*dim]=v
    # (the PyTorch module hard-codes 768/1536; this generalizes with `dim`).
    # F.linear(x, W) = x @ W.T, so transpose; per-head columns are contiguous.
    wqT = qkv_w[:subset].T * scale                           # scale folded into Q
    wkT = qkv_w[dim:dim + subset].T
    wvT = qkv_w[2 * dim:2 * dim + subset].T
    bq = qkv_b[:subset] * scale
    bk = qkv_b[dim:dim + subset]
    bv = qkv_b[2 * dim:2 * dim + subset]

    def group_cols(w):                                       # (dim, subset) -> (ng, dim, GH)
        return w.reshape(dim, ng, GH).transpose(1, 0, 2)

    wqkv = jnp.concatenate([group_cols(wqT), group_cols(wkT), group_cols(wvT)],
                           axis=-1)                          # (ng, dim, 3*GH)
    bqkv = jnp.concatenate([bq.reshape(ng, 1, GH), bk.reshape(ng, 1, GH),
                            bv.reshape(ng, 1, GH)], axis=-1)  # (ng, 1, 3*GH)
    wo = proj_w[:, :subset].T.reshape(ng, GH, dim)           # (ng, GH, dim)
    bo = proj_b.reshape(1, dim)

    # Lane-dense padding of the model dim (no-op when dim % 128 == 0).
    dim_p = ((dim + 127) // 128) * 128
    pad_d = dim_p - dim
    if pad_d:
        wqkv = jnp.pad(wqkv, ((0, 0), (0, pad_d), (0, 0)))
        wo = jnp.pad(wo, ((0, 0), (0, 0), (0, pad_d)))
        bo = jnp.pad(bo, ((0, 0), (0, pad_d)))

    prepared = (wqkv.astype(jnp.bfloat16), bqkv.astype(jnp.float32),
                wo.astype(jnp.bfloat16), bo.astype(jnp.float32))
    meta = dict(dim=dim, dim_p=dim_p, num_groups=ng, group_size=G, head_dim=hd)
    return prepared, meta


def modified_attention_apply(x, prepared, meta):
    """Run the Pallas attention kernel with pre-laid-out weights."""
    wqkv, bqkv, wo, bo = prepared
    B, N, dim = x.shape
    assert dim == meta['dim']
    dim_p = meta['dim_p']
    ng, G, hd = meta['num_groups'], meta['group_size'], meta['head_dim']
    GH = G * hd

    pad_d = dim_p - dim
    if pad_d:
        x = jnp.pad(x, ((0, 0), (0, 0), (0, pad_d)))

    # --- VMEM-budget-driven batch block ---------------------------------
    # 2x double-buffered x block + 2x out block + xb (bf16) + acc (f32)
    # + fused-qkv f32 temp + per-head (N, N) f32 score temp.
    x_bytes = x.dtype.itemsize
    per_batch = N * dim_p * (2 * x_bytes + 2 * x_bytes + 2 + 4)
    per_batch += N * 3 * GH * 4 + N * N * 4
    budget = 20 * 1024 * 1024                 # conservative across v5e/v6e/v7x
    BB = max(1, int(budget // max(per_batch, 1)))
    BB = min(BB, B)
    if B > 1:
        BB = min(BB, (B + 1) // 2)            # keep >= 2 batch blocks (dual-TC chips)
    B_p = ((B + BB - 1) // BB) * BB
    if B_p != B:
        x = jnp.pad(x, ((0, B_p - B), (0, 0), (0, 0)))
    nb = B_p // BB

    kernel = partial(_attn_group_kernel, group_size=G, head_dim=hd)

    out = pl.pallas_call(
        kernel,
        out_shape=jax.ShapeDtypeStruct((B_p, N, dim_p), x.dtype),
        grid=(nb, ng),
        in_specs=[
            pl.BlockSpec((BB, N, dim_p), lambda b, g: (b, 0, 0)),        # x (resident across groups)
            pl.BlockSpec((ng, dim_p, 3 * GH), lambda b, g: (0, 0, 0)),   # wqkv (resident, all groups)
            pl.BlockSpec((ng, 1, 3 * GH), lambda b, g: (0, 0, 0)),       # bqkv (resident)
            pl.BlockSpec((ng, GH, dim_p), lambda b, g: (0, 0, 0)),       # wo (resident)
            pl.BlockSpec((1, dim_p), lambda b, g: (0, 0)),               # bo (resident)
        ],
        out_specs=pl.BlockSpec((BB, N, dim_p), lambda b, g: (b, 0, 0)),
        scratch_shapes=[
            pltpu.VMEM((BB * N, dim_p), jnp.bfloat16),   # cached bf16 activations
            pltpu.VMEM((BB * N, dim_p), jnp.float32),    # f32 output accumulator
        ],
        compiler_params=pltpu.CompilerParams(
            dimension_semantics=("parallel", "arbitrary"),
            vmem_limit_bytes=48 * 1024 * 1024),
    )(x, wqkv, bqkv, wo, bo)

    return out[:B, :, :dim]


def modified_attention_forward(x, qkv_w, qkv_b, proj_w, proj_b,
                               *, num_heads, dim_scale):
    """Convenience wrapper: prep + apply (prep should be cached in real use)."""
    prepared, meta = prepare_modified_attention_weights(
        qkv_w, qkv_b, proj_w, proj_b, num_heads=num_heads, dim_scale=dim_scale)
    return modified_attention_apply(x, prepared, meta)


def _reference_forward(x, qkv_w, qkv_b, proj_w, proj_b, *, num_heads, dim_scale):
    """Pure-JAX (f32) re-implementation of the PyTorch forward, for checking."""
    B, N, dim = x.shape
    subset = int(dim * dim_scale)
    h_sub = int(num_heads * dim_scale)
    hd = dim // num_heads
    scale = float(hd) ** -0.5

    sub_qkv_w = jnp.concatenate(
        [qkv_w[:subset], qkv_w[dim:dim + subset], qkv_w[2 * dim:2 * dim + subset]], axis=0)
    sub_qkv_b = jnp.concatenate(
        [qkv_b[:subset], qkv_b[dim:dim + subset], qkv_b[2 * dim:2 * dim + subset]], axis=0)

    qkv_out = x @ sub_qkv_w.T + sub_qkv_b                     # (B, N, 3*subset)
    qkv = qkv_out.reshape(B, N, 3, h_sub, hd).transpose(2, 0, 3, 1, 4)
    q, k, v = qkv[0], qkv[1], qkv[2]                          # (B, H, N, hd)

    q = q * scale
    attn = q @ jnp.swapaxes(k, -2, -1)                        # (B, H, N, N)
    attn = jax.nn.softmax(attn, axis=-1)
    out = attn @ v                                            # (B, H, N, hd)
    out = jnp.swapaxes(out, 1, 2).reshape(B, N, subset)

    sub_proj_w = proj_w[:, :subset]
    return out @ sub_proj_w.T + proj_b                        # (B, N, dim)


if __name__ == "__main__":
    # Small synthetic configuration: dim=64, num_heads=4 -> head_dim=16,
    # subnetwork flag 'm' -> dim_scale=1/2 -> subset_dim=32, 2 sub-heads
    # (both sub-heads fall into a single fused head-group here).
    B, N, dim = 2, 16, 64
    num_heads = 4
    dim_scale = 0.5  # configure_subnetwork('m') with default scale_factors

    key = jax.random.PRNGKey(0)
    kx, kw1, kb1, kw2, kb2 = jax.random.split(key, 5)

    x = jax.random.normal(kx, (B, N, dim), dtype=jnp.float32)
    qkv_w = jax.random.normal(kw1, (3 * dim, dim), dtype=jnp.float32) * 0.02
    qkv_b = jax.random.normal(kb1, (3 * dim,), dtype=jnp.float32) * 0.02
    proj_w = jax.random.normal(kw2, (dim, dim), dtype=jnp.float32) * 0.02
    proj_b = jax.random.normal(kb2, (dim,), dtype=jnp.float32) * 0.02

    # One-time weight prep (cacheable), then the Pallas forward.
    prepared, meta = prepare_modified_attention_weights(
        qkv_w, qkv_b, proj_w, proj_b, num_heads=num_heads, dim_scale=dim_scale)
    out = modified_attention_apply(x, prepared, meta)
    out = jax.block_until_ready(out)

    ref = _reference_forward(
        x, qkv_w, qkv_b, proj_w, proj_b,
        num_heads=num_heads, dim_scale=dim_scale)

    assert out.shape == (B, N, dim)
    # bf16 MXU operands (f32 accumulation, f32 softmax stats) + approx
    # reciprocal in the softmax denominator -> loosened tolerance.
    assert jnp.allclose(out, ref, atol=1e-2, rtol=1e-2), "mismatch vs reference"

    print("KERNEL_OK")
</pallas_src>

<mosaic_0001>
module attributes {stable_mosaic.version = 11 : i64} {
  func.func @_attn_group_kernel(%arg0: i32, %arg1: i32, %arg2: memref<1x16x128xf32, #tpu.memory_space<vmem>>, %arg3: memref<1x128x96xbf16, #tpu.memory_space<vmem>>, %arg4: memref<1x1x96xf32, #tpu.memory_space<vmem>>, %arg5: memref<1x32x128xbf16, #tpu.memory_space<vmem>>, %arg6: memref<1x128xf32, #tpu.memory_space<vmem>>, %arg7: memref<1x16x128xf32, #tpu.memory_space<vmem>>, %arg8: memref<16x128xbf16, #tpu.memory_space<vmem>>, %arg9: memref<16x128xf32, #tpu.memory_space<vmem>>) attributes {dimension_semantics = [#tpu.dimension_semantics<parallel>, #tpu.dimension_semantics<arbitrary>], iteration_bounds = array<i64: 2, 1>, scalar_prefetch = 0 : i64, scratch_operands = 2 : i64, tpu.core_type = #tpu.core_type<tc>, window_params = [{transform_indices = @transform_0, window_bounds = array<i64: 1, 16, 128>}, {pipeline_mode = #tpu.pipeline_mode<synchronous>, transform_indices = @transform_1, window_bounds = array<i64: 1, 128, 96>}, {pipeline_mode = #tpu.pipeline_mode<synchronous>, transform_indices = @transform_2, window_bounds = array<i64: 1, 1, 96>}, {pipeline_mode = #tpu.pipeline_mode<synchronous>, transform_indices = @transform_3, window_bounds = array<i64: 1, 32, 128>}, {pipeline_mode = #tpu.pipeline_mode<synchronous>, transform_indices = @transform_4, window_bounds = array<i64: 1, 128>}, {transform_indices = @transform_5, window_bounds = array<i64: 1, 16, 128>}]} {
    %c0_i32 = arith.constant 0 : i32
    %0 = arith.cmpi eq, %arg1, %c0_i32 : i32
    %1 = arith.extui %0 : i1 to i32
    %c0_i32_0 = arith.constant 0 : i32
    %2 = arith.cmpi ne, %1, %c0_i32_0 : i32
    scf.if %2 {
      %c0_23 = arith.constant 0 : index
      %c0_24 = arith.constant 0 : index
      %c0_25 = arith.constant 0 : index
      %71 = vector.load %arg2[%c0_23, %c0_24, %c0_25] : memref<1x16x128xf32, #tpu.memory_space<vmem>>, vector<1x16x128xf32>
      %72 = vector.shape_cast %71 : vector<1x16x128xf32> to vector<16x128xf32>
      %73 = arith.truncf %72 : vector<16x128xf32> to vector<16x128xbf16>
      %c0_26 = arith.constant 0 : index
      %c0_27 = arith.constant 0 : index
      %74 = vector.load %arg8[%c0_26, %c0_27] : memref<16x128xbf16, #tpu.memory_space<vmem>>, vector<16x128xbf16>
      tpu.vector_store %arg8[%c0_26, %c0_27], %73 {strides = array<i32>} : memref<16x128xbf16, #tpu.memory_space<vmem>>, vector<16x128xbf16>,
      %cst_28 = arith.constant 0.000000e+00 : f32
      %75 = vector.broadcast %cst_28 : f32 to vector<16x128xf32>
      %c0_29 = arith.constant 0 : index
      %c0_30 = arith.constant 0 : index
      %76 = vector.load %arg9[%c0_29, %c0_30] : memref<16x128xf32, #tpu.memory_space<vmem>>, vector<16x128xf32>
      tpu.vector_store %arg9[%c0_29, %c0_30], %75 {strides = array<i32>} : memref<16x128xf32, #tpu.memory_space<vmem>>, vector<16x128xf32>,
    } else {
    }
    %c0 = arith.constant 0 : index
    %c0_1 = arith.constant 0 : index
    %3 = vector.load %arg8[%c0, %c0_1] : memref<16x128xbf16, #tpu.memory_space<vmem>>, vector<16x128xbf16>
    %4 = arith.index_cast %arg1 : i32 to index
    %c0_2 = arith.constant 0 : index
    %c0_3 = arith.constant 0 : index
    %5 = vector.load %arg3[%4, %c0_2, %c0_3] : memref<1x128x96xbf16, #tpu.memory_space<vmem>>, vector<1x128x96xbf16>
    %6 = vector.shape_cast %5 : vector<1x128x96xbf16> to vector<128x96xbf16>
    %cst = arith.constant dense<0.000000e+00> : vector<16x96xf32>
    %7 = tpu.matmul %3, %6, %cst {dimension_numbers = #tpu.dot_dimension_numbers<[1], [0], [0], [1], [0, 0, 1, 1], [], []>} : vector<16x128xbf16>, vector<128x96xbf16>, vector<16x96xf32> -> vector<16x96xf32>
    %8 = arith.index_cast %arg1 : i32 to index
    %c0_4 = arith.constant 0 : index
    %c0_5 = arith.constant 0 : index
    %9 = vector.load %arg4[%8, %c0_4, %c0_5] : memref<1x1x96xf32, #tpu.memory_space<vmem>>, vector<1x1x96xf32>
    %10 = vector.shape_cast %9 : vector<1x1x96xf32> to vector<1x96xf32>
    %11 = vector.broadcast %10 : vector<1x96xf32> to vector<16x96xf32>
    %12 = arith.addf %7, %11 : vector<16x96xf32>
    %13 = vector.extract_strided_slice %12 {offsets = [0, 0], sizes = [16, 16], strides = [1, 1]} : vector<16x96xf32> to vector<16x16xf32>
    %14 = vector.extract_strided_slice %12 {offsets = [0, 32], sizes = [16, 16], strides = [1, 1]} : vector<16x96xf32> to vector<16x16xf32>
    %15 = vector.extract_strided_slice %12 {offsets = [0, 64], sizes = [16, 16], strides = [1, 1]} : vector<16x96xf32> to vector<16x16xf32>
    %16 = vector.shape_cast %13 : vector<16x16xf32> to vector<1x16x16xf32>
    %17 = arith.truncf %16 : vector<1x16x16xf32> to vector<1x16x16xbf16>
    %18 = vector.shape_cast %14 : vector<16x16xf32> to vector<1x16x16xf32>
    %19 = arith.truncf %18 : vector<1x16x16xf32> to vector<1x16x16xbf16>
    %20 = vector.shape_cast %15 : vector<16x16xf32> to vector<1x16x16xf32>
    %21 = arith.truncf %20 : vector<1x16x16xf32> to vector<1x16x16xbf16>
    "tpu.trace_start"() <{level = 10 : i32, message = "bqd,bkd->bqk"}> : () -> ()
    %cst_6 = arith.constant dense<0.000000e+00> : vector<1x16x16xf32>
    %22 = tpu.matmul %17, %19, %cst_6 {dimension_numbers = #tpu.dot_dimension_numbers<[2], [2], [1], [1], [0, 0, 0, 1, 1, 1], [0], [0]>} : vector<1x16x16xbf16>, vector<1x16x16xbf16>, vector<1x16x16xf32> -> vector<1x16x16xf32>
    "tpu.trace_stop"() : () -> ()
    %cst_7 = arith.constant dense<0xFF800000> : vector<1x16xf32>
    %23 = vector.multi_reduction <maximumf>, %22, %cst_7 [2] : vector<1x16x16xf32> to vector<1x16xf32>
    %24 = vector.shape_cast %23 : vector<1x16xf32> to vector<1x16x1xf32>
    %25 = vector.broadcast %24 : vector<1x16x1xf32> to vector<1x16x16xf32>
    %26 = arith.subf %22, %25 : vector<1x16x16xf32>
    %27 = math.exp %26 : vector<1x16x16xf32>
    %cst_8 = arith.constant dense<0.000000e+00> : vector<1x16xf32>
    %28 = vector.multi_reduction <add>, %27, %cst_8 [2] : vector<1x16x16xf32> to vector<1x16xf32>
    %29 = vector.shape_cast %28 : vector<1x16xf32> to vector<1x16x1xf32>
    %30 = arith.truncf %27 : vector<1x16x16xf32> to vector<1x16x16xbf16>
    "tpu.trace_start"() <{level = 10 : i32, message = "bqk,bkd->bqd"}> : () -> ()
    %cst_9 = arith.constant dense<0.000000e+00> : vector<1x16x16xf32>
    %31 = tpu.matmul %30, %21, %cst_9 {dimension_numbers = #tpu.dot_dimension_numbers<[2], [1], [1], [2], [0, 0, 0, 1, 1, 2], [0], [0]>} : vector<1x16x16xbf16>, vector<1x16x16xbf16>, vector<1x16x16xf32> -> vector<1x16x16xf32>
    "tpu.trace_stop"() : () -> ()
    %32 = tpu.reciprocal %29 {approx = true} : vector<1x16x1xf32> -> vector<1x16x1xf32>
    %33 = vector.broadcast %32 : vector<1x16x1xf32> to vector<1x16x16xf32>
    %34 = arith.mulf %31, %33 : vector<1x16x16xf32>
    %35 = vector.shape_cast %34 : vector<1x16x16xf32> to vector<16x16xf32>
    %36 = vector.extract_strided_slice %12 {offsets = [0, 16], sizes = [16, 16], strides = [1, 1]} : vector<16x96xf32> to vector<16x16xf32>
    %37 = vector.extract_strided_slice %12 {offsets = [0, 48], sizes = [16, 16], strides = [1, 1]} : vector<16x96xf32> to vector<16x16xf32>
    %38 = vector.extract_strided_slice %12 {offsets = [0, 80], sizes = [16, 16], strides = [1, 1]} : vector<16x96xf32> to vector<16x16xf32>
    %39 = vector.shape_cast %36 : vector<16x16xf32> to vector<1x16x16xf32>
    %40 = arith.truncf %39 : vector<1x16x16xf32> to vector<1x16x16xbf16>
    %41 = vector.shape_cast %37 : vector<16x16xf32> to vector<1x16x16xf32>
    %42 = arith.truncf %41 : vector<1x16x16xf32> to vector<1x16x16xbf16>
    %43 = vector.shape_cast %38 : vector<16x16xf32> to vector<1x16x16xf32>
    %44 = arith.truncf %43 : vector<1x16x16xf32> to vector<1x16x16xbf16>
    "tpu.trace_start"() <{level = 10 : i32, message = "bqd,bkd->bqk"}> : () -> ()
    %cst_10 = arith.constant dense<0.000000e+00> : vector<1x16x16xf32>
    %45 = tpu.matmul %40, %42, %cst_10 {dimension_numbers = #tpu.dot_dimension_numbers<[2], [2], [1], [1], [0, 0, 0, 1, 1, 1], [0], [0]>} : vector<1x16x16xbf16>, vector<1x16x16xbf16>, vector<1x16x16xf32> -> vector<1x16x16xf32>
    "tpu.trace_stop"() : () -> ()
    %cst_11 = arith.constant dense<0xFF800000> : vector<1x16xf32>
    %46 = vector.multi_reduction <maximumf>, %45, %cst_11 [2] : vector<1x16x16xf32> to vector<1x16xf32>
    %47 = vector.shape_cast %46 : vector<1x16xf32> to vector<1x16x1xf32>
    %48 = vector.broadcast %47 : vector<1x16x1xf32> to vector<1x16x16xf32>
    %49 = arith.subf %45, %48 : vector<1x16x16xf32>
    %50 = math.exp %49 : vector<1x16x16xf32>
    %cst_12 = arith.constant dense<0.000000e+00> : vector<1x16xf32>
    %51 = vector.multi_reduction <add>, %50, %cst_12 [2] : vector<1x16x16xf32> to vector<1x16xf32>
    %52 = vector.shape_cast %51 : vector<1x16xf32> to vector<1x16x1xf32>
    %53 = arith.truncf %50 : vector<1x16x16xf32> to vector<1x16x16xbf16>
    "tpu.trace_start"() <{level = 10 : i32, message = "bqk,bkd->bqd"}> : () -> ()
    %cst_13 = arith.constant dense<0.000000e+00> : vector<1x16x16xf32>
    %54 = tpu.matmul %53, %44, %cst_13 {dimension_numbers = #tpu.dot_dimension_numbers<[2], [1], [1], [2], [0, 0, 0, 1, 1, 2], [0], [0]>} : vector<1x16x16xbf16>, vector<1x16x16xbf16>, vector<1x16x16xf32> -> vector<1x16x16xf32>
    "tpu.trace_stop"() : () -> ()
    %55 = tpu.reciprocal %52 {approx = true} : vector<1x16x1xf32> -> vector<1x16x1xf32>
    %56 = vector.broadcast %55 : vector<1x16x1xf32> to vector<1x16x16xf32>
    %57 = arith.mulf %54, %56 : vector<1x16x16xf32>
    %58 = vector.shape_cast %57 : vector<1x16x16xf32> to vector<16x16xf32>
    %59 = tpu.concatenate %35, %58 in 1 : vector<16x16xf32>, vector<16x16xf32> -> vector<16x32xf32>
    %60 = arith.truncf %59 : vector<16x32xf32> to vector<16x32xbf16>
    %c0_14 = arith.constant 0 : index
    %c0_15 = arith.constant 0 : index
    %61 = vector.load %arg9[%c0_14, %c0_15] : memref<16x128xf32, #tpu.memory_space<vmem>>, vector<16x128xf32>
    %62 = arith.index_cast %arg1 : i32 to index
    %c0_16 = arith.constant 0 : index
    %c0_17 = arith.constant 0 : index
    %63 = vector.load %arg5[%62, %c0_16, %c0_17] : memref<1x32x128xbf16, #tpu.memory_space<vmem>>, vector<1x32x128xbf16>
    %64 = vector.shape_cast %63 : vector<1x32x128xbf16> to vector<32x128xbf16>
    %cst_18 = arith.constant dense<0.000000e+00> : vector<16x128xf32>
    %65 = tpu.matmul %60, %64, %cst_18 {dimension_numbers = #tpu.dot_dimension_numbers<[1], [0], [0], [1], [0, 0, 1, 1], [], []>} : vector<16x32xbf16>, vector<32x128xbf16>, vector<16x128xf32> -> vector<16x128xf32>
    %66 = arith.addf %61, %65 : vector<16x128xf32>
    %c0_19 = arith.constant 0 : index
    %c0_20 = arith.constant 0 : index
    %67 = vector.load %arg9[%c0_19, %c0_20] : memref<16x128xf32, #tpu.memory_space<vmem>>, vector<16x128xf32>
    tpu.vector_store %arg9[%c0_19, %c0_20], %66 {strides = array<i32>} : memref<16x128xf32, #tpu.memory_space<vmem>>, vector<16x128xf32>,
    %c0_i32_21 = arith.constant 0 : i32
    %68 = arith.cmpi eq, %arg1, %c0_i32_21 : i32
    %69 = arith.extui %68 : i1 to i32
    %c0_i32_22 = arith.constant 0 : i32
    %70 = arith.cmpi ne, %69, %c0_i32_22 : i32
    scf.if %70 {
      %c0_23 = arith.constant 0 : index
      %c0_24 = arith.constant 0 : index
      %71 = vector.load %arg9[%c0_23, %c0_24] : memref<16x128xf32, #tpu.memory_space<vmem>>, vector<16x128xf32>
      %c0_25 = arith.constant 0 : index
      %c0_26 = arith.constant 0 : index
      %72 = vector.load %arg6[%c0_25, %c0_26] : memref<1x128xf32, #tpu.memory_space<vmem>>, vector<1x128xf32>
      %73 = vector.broadcast %72 : vector<1x128xf32> to vector<16x128xf32>
      %74 = arith.addf %71, %73 : vector<16x128xf32>
      %75 = vector.shape_cast %74 : vector<16x128xf32> to vector<1x16x128xf32>
      %c0_27 = arith.constant 0 : index
      %c0_28 = arith.constant 0 : index
      %c0_29 = arith.constant 0 : index
      %76 = vector.load %arg7[%c0_27, %c0_28, %c0_29] : memref<1x16x128xf32, #tpu.memory_space<vmem>>, vector<1x16x128xf32>
      tpu.vector_store %arg7[%c0_27, %c0_28, %c0_29], %75 {strides = array<i32>} : memref<1x16x128xf32, #tpu.memory_space<vmem>>, vector<1x16x128xf32>,
    } else {
    }
    return
  }
  func.func @transform_0(%arg0: i32, %arg1: i32) -> (i32, i32, i32) {
    %c0_i32 = arith.constant 0 : i32
    %c0_i32_0 = arith.constant 0 : i32
    %c0_i32_1 = arith.constant 0 : i32
    return %arg0, %c0_i32, %c0_i32_0 : i32, i32, i32
  }
  func.func @transform_1(%arg0: i32, %arg1: i32) -> (i32, i32, i32) {
    %c0_i32 = arith.constant 0 : i32
    %c0_i32_0 = arith.constant 0 : i32
    %c0_i32_1 = arith.constant 0 : i32
    %c0_i32_2 = arith.constant 0 : i32
    return %c0_i32, %c0_i32_0, %c0_i32_1 : i32, i32, i32
  }
  func.func @transform_2(%arg0: i32, %arg1: i32) -> (i32, i32, i32) {
    %c0_i32 = arith.constant 0 : i32
    %c0_i32_0 = arith.constant 0 : i32
    %c0_i32_1 = arith.constant 0 : i32
    %c0_i32_2 = arith.constant 0 : i32
    return %c0_i32, %c0_i32_0, %c0_i32_1 : i32, i32, i32
  }
  func.func @transform_3(%arg0: i32, %arg1: i32) -> (i32, i32, i32) {
    %c0_i32 = arith.constant 0 : i32
    %c0_i32_0 = arith.constant 0 : i32
    %c0_i32_1 = arith.constant 0 : i32
    %c0_i32_2 = arith.constant 0 : i32
    return %c0_i32, %c0_i32_0, %c0_i32_1 : i32, i32, i32
  }
  func.func @transform_4(%arg0: i32, %arg1: i32) -> (i32, i32) {
    %c0_i32 = arith.constant 0 : i32
    %c0_i32_0 = arith.constant 0 : i32
    %c0_i32_1 = arith.constant 0 : i32
    return %c0_i32, %c0_i32_0 : i32, i32
  }
  func.func @transform_5(%arg0: i32, %arg1: i32) -> (i32, i32, i32) {
    %c0_i32 = arith.constant 0 : i32
    %c0_i32_0 = arith.constant 0 : i32
    %c0_i32_1 = arith.constant 0 : i32
    return %arg0, %c0_i32, %c0_i32_0 : i32, i32, i32
  }
}

</mosaic_0001>

<llo_original>
// kernel: tpu_custom_call.1
$region0: #{tpu_custom_call.1}
  #allocation0 [shape = 'u32[]', space=smem, size = 0x4, offset = 0x4, fixed_abs, tag = 'smem constant byte address 0x4 - core index']
  #allocation1 [shape = 'u32[144,128]{1,0:T(1,128)}', space=vmem, size = 0x12000, scoped, tag = 'internal scratch']
  #allocation2 [shape = 'bf16[16,128]{1,0:T(16,128)(2,1)}', space=vmem, size = 0x1000, scoped, tag = 'scratch operand']
  #allocation3 [shape = 'f32[16,128]{1,0:T(8,128)}', space=vmem, size = 0x2000, scoped, tag = 'scratch operand']
  %s0 = inlined_call_operand.vmem [shape: f32[2,16,128], index: 0, kind: input, shape index: {}]
  %s1 = inlined_call_operand.vmem [shape: bf16[1,128,96], index: 1, kind: input, shape index: {}]
  %s2 = inlined_call_operand.vmem [shape: f32[1,1,96], index: 2, kind: input, shape index: {}]
  %s3 = inlined_call_operand.vmem [shape: bf16[1,32,128], index: 3, kind: input, shape index: {}]
  %s4 = inlined_call_operand.vmem [shape: f32[1,128], index: 4, kind: input, shape index: {}]
  %s5 = inlined_call_operand.hbm [shape: f32[2,16,128], index: 5, kind: output, shape index: {}]
  %s6 = sld [smem:[#allocation0]]
  $region61: #{tpu_custom_call.1} parent=0
    _
  %s8 = ssub.s32 1, %s6
  %s9 = scalar_select 0, %s8, %s6
  $region1: #{tpu_custom_call.1} parent=0
    #allocation4 [shape = 'u8[16384]{0}', space=vmem, size = 0x4000, scoped, tag = 'output window, operand 0']
    #allocation5 [shape = 's32[2]{0}', space=sflag, size = 0x8, scoped, tag = 'scoped memory for tpu_custom_call.1']
    %10 = vsyncpa [#allocation5], 0
    %s11 = scalar_lea.sflag [#allocation5], 1
    %12 = vsyncpa %s11, 0
    loop: start=0, step=1, limit=4
    $region2: #{tpu_custom_call.1} parent=1 // loop_pre_header
      _
    $region3: #{tpu_custom_call.1} parent=1 // loop_header
      %s14 = sphi 0, %s18
      %p15 = scmp.ge.s32.totalorder %s14, 4
      %s21 = sphi 0, %s33
      %s22 = sphi 0, %s29
      %s23 = sphi 0, %s21
      %s24 = sphi 0, %s22
      %s25 = sphi 0, %s23
      %s26 = sphi 0, %s24
      %s36 = sphi 0, %s38
      %s39 = sphi 0, %s36
      %s40 = sphi 0, %s39
      %s56 = sphi 0, %s40
      %s60 = sphi 0, %s60
      %s62 = sphi 0, %s60
      %s63 = sphi 0, %s62
      %s77 = sphi 0, %s63
      %s81 = sphi 0, %s81
      %s83 = sphi 0, %s81
      %s84 = sphi 0, %s83
      %s98 = sphi 0, %s84
      %s102 = sphi 0, %s102
      %s104 = sphi 0, %s102
      %s105 = sphi 0, %s104
      %s119 = sphi 0, %s105
      %s123 = sphi 0, %s123
      %s125 = sphi 0, %s123
      %s126 = sphi 0, %s125
      %s140 = sphi 0, %s126
      %s146 = sphi 0, %s148
      %s149 = sphi 0, %s146
      %s150 = sphi 0, %s149
      %s166 = sphi 0, %s150
    $region4: #{tpu_custom_call.1} parent=1 // loop_header_branch
      %17 = sbr.rel (%p15) target = $region8
    $region5: #{tpu_custom_call.1} parent=1 // loop_body
      %s19 = ssub.s32 %s14, 1
      %s20 = ssub.s32 %s14, 2
      %s27 = sadd.s32 1, %s22
      %p28 = scmp.ge.s32.totalorder %s27, 1
      %s29 = scalar_select %p28, 0, %s27
      %s30 = sadd.s32 1, %s21
      %s31 = scalar_select %p28, %s30, %s21
      %p32 = scmp.ge.s32.totalorder %s31, 2
      %s33 = scalar_select %p32, 0, %s31
      %s34 = ssub.s32 %s21, %s33
      %p35 = scmp.eq.s32.totalorder %s34, 0
      %s37 = sadd.s32 %s36, 1
      %s38 = scalar_select %p35, %s36, %s37
      %p41 = pneg %p35
      %p42 = scmp.eq.s32.totalorder %s14, 1
      %p43 = por %p41, %p42
      %p44 = scmp.ne.s32.totalorder %s36, %s39
      %p45 = scmp.eq.s32.totalorder %s14, 0
      %p46 = por %p44, %p45
      %p47 = scmp.ne.s32.totalorder %s36, %s39
      %p48 = scmp.eq.s32.totalorder %s19, 1
      %p49 = por %p47, %p48
      %p50 = scmp.ne.s32.totalorder %s39, %s40
      %p51 = scmp.eq.s32.totalorder %s19, 0
      %p52 = por %p50, %p51
      %p53 = scmp.ne.s32.totalorder %s39, %s40
      %p54 = scmp.eq.s32.totalorder %s20, 1
      %p55 = por %p53, %p54
      %p57 = scmp.ne.s32.totalorder %s40, %s56
      %p58 = scmp.eq.s32.totalorder %s20, 0
      %p59 = por %p57, %p58
      %s61 = sadd.s32 %s60, 1
      %p64 = scmp.eq.s32.totalorder %s14, 1
      %p65 = scmp.ne.s32.totalorder %s60, %s62
      %p66 = scmp.eq.s32.totalorder %s14, 0
      %p67 = por %p65, %p66
      %p68 = scmp.ne.s32.totalorder %s60, %s62
      %p69 = scmp.eq.s32.totalorder %s19, 1
      %p70 = por %p68, %p69
      %p71 = scmp.ne.s32.totalorder %s62, %s63
      %p72 = scmp.eq.s32.totalorder %s19, 0
      %p73 = por %p71, %p72
      %p74 = scmp.ne.s32.totalorder %s62, %s63
      %p75 = scmp.eq.s32.totalorder %s20, 1
      %p76 = por %p74, %p75
      %p78 = scmp.ne.s32.totalorder %s63, %s77
      %p79 = scmp.eq.s32.totalorder %s20, 0
      %p80 = por %p78, %p79
      %s82 = sadd.s32 %s81, 1
      %p85 = scmp.eq.s32.totalorder %s14, 1
      %p86 = scmp.ne.s32.totalorder %s81, %s83
      %p87 = scmp.eq.s32.totalorder %s14, 0
      %p88 = por %p86, %p87
      %p89 = scmp.ne.s32.totalorder %s81, %s83
      %p90 = scmp.eq.s32.totalorder %s19, 1
      %p91 = por %p89, %p90
      %p92 = scmp.ne.s32.totalorder %s83, %s84
      %p93 = scmp.eq.s32.totalorder %s19, 0
      %p94 = por %p92, %p93
      %p95 = scmp.ne.s32.totalorder %s83, %s84
      %p96 = scmp.eq.s32.totalorder %s20, 1
      %p97 = por %p95, %p96
      %p99 = scmp.ne.s32.totalorder %s84, %s98
      %p100 = scmp.eq.s32.totalorder %s20, 0
      %p101 = por %p99, %p100
      %s103 = sadd.s32 %s102, 1
      %p106 = scmp.eq.s32.totalorder %s14, 1
      %p107 = scmp.ne.s32.totalorder %s102, %s104
      %p108 = scmp.eq.s32.totalorder %s14, 0
      %p109 = por %p107, %p108
      %p110 = scmp.ne.s32.totalorder %s102, %s104
      %p111 = scmp.eq.s32.totalorder %s19, 1
      %p112 = por %p110, %p111
      %p113 = scmp.ne.s32.totalorder %s104, %s105
      %p114 = scmp.eq.s32.totalorder %s19, 0
      %p115 = por %p113, %p114
      %p116 = scmp.ne.s32.totalorder %s104, %s105
      %p117 = scmp.eq.s32.totalorder %s20, 1
      %p118 = por %p116, %p117
      %p120 = scmp.ne.s32.totalorder %s105, %s119
      %p121 = scmp.eq.s32.totalorder %s20, 0
      %p122 = por %p120, %p121
      %s124 = sadd.s32 %s123, 1
      %p127 = scmp.eq.s32.totalorder %s14, 1
      %p128 = scmp.ne.s32.totalorder %s123, %s125
      %p129 = scmp.eq.s32.totalorder %s14, 0
      %p130 = por %p128, %p129
      %p131 = scmp.ne.s32.totalorder %s123, %s125
      %p132 = scmp.eq.s32.totalorder %s19, 1
      %p133 = por %p131, %p132
      %p134 = scmp.ne.s32.totalorder %s125, %s126
      %p135 = scmp.eq.s32.totalorder %s19, 0
      %p136 = por %p134, %p135
      %p137 = scmp.ne.s32.totalorder %s125, %s126
      %p138 = scmp.eq.s32.totalorder %s20, 1
      %p139 = por %p137, %p138
      %p141 = scmp.ne.s32.totalorder %s126, %s140
      %p142 = scmp.eq.s32.totalorder %s20, 0
      %p143 = por %p141, %p142
      %s144 = ssub.s32 %s21, %s33
      %p145 = scmp.eq.s32.totalorder %s144, 0
      %s147 = sadd.s32 %s146, 1
      %s148 = scalar_select %p145, %s146, %s147
      %p151 = pneg %p145
      %p152 = scmp.eq.s32.totalorder %s14, 1
      %p153 = por %p151, %p152
      %p154 = scmp.ne.s32.totalorder %s146, %s149
      %p155 = scmp.eq.s32.totalorder %s14, 0
      %p156 = por %p154, %p155
      %p157 = scmp.ne.s32.totalorder %s146, %s149
      %p158 = scmp.eq.s32.totalorder %s19, 1
      %p159 = por %p157, %p158
      %p160 = scmp.ne.s32.totalorder %s149, %s150
      %p161 = scmp.eq.s32.totalorder %s19, 0
      %p162 = por %p160, %p161
      %p163 = scmp.ne.s32.totalorder %s149, %s150
      %p164 = scmp.eq.s32.totalorder %s20, 1
      %p165 = por %p163, %p164
      %p167 = scmp.ne.s32.totalorder %s150, %s166
      %p168 = scmp.eq.s32.totalorder %s20, 0
      %p169 = por %p167, %p168
      %p170 = scmp.le.s32.totalorder 1, %s14
      %p171 = scmp.lt.s32.totalorder %s14, 3
      %p172 = pnand %p170, %p171
      %p173 = pneg %p172
      // Predicated region
      $region9: #{tpu_custom_call.1} parent=5 // pred_check
        _
      $region10: #{tpu_custom_call.1} parent=5 // pred_check_branch
        %175 = sbr.rel (%p172) target = $region12
      $region11: #{tpu_custom_call.1} parent=5 // pred_region
        %s176 = ssub.s32 %s14, 1
        // Predicated region
        $region13: #{tpu_custom_call.1} parent=11 // pred_check
          %p177 = pneg %p73
        $region14: #{tpu_custom_call.1} parent=11 // pred_check_branch
          %179 = sbr.rel (%p177) target = $region16
        $region15: #{tpu_custom_call.1} parent=11 // pred_region
          _
        $region16: #{tpu_custom_call.1} parent=11 // pred_fallthru
          _
        // Predicated region
        $region17: #{tpu_custom_call.1} parent=11 // pred_check
          %p180 = pneg %p94
        $region18: #{tpu_custom_call.1} parent=11 // pred_check_branch
          %182 = sbr.rel (%p180) target = $region20
        $region19: #{tpu_custom_call.1} parent=11 // pred_region
          _
        $region20: #{tpu_custom_call.1} parent=11 // pred_fallthru
          _
        // Predicated region
        $region21: #{tpu_custom_call.1} parent=11 // pred_check
          %p183 = pneg %p115
        $region22: #{tpu_custom_call.1} parent=11 // pred_check_branch
          %185 = sbr.rel (%p183) target = $region24
        $region23: #{tpu_custom_call.1} parent=11 // pred_region
          _
        $region24: #{tpu_custom_call.1} parent=11 // pred_fallthru
          _
        // Predicated region
        $region25: #{tpu_custom_call.1} parent=11 // pred_check
          %p186 = pneg %p136
        $region26: #{tpu_custom_call.1} parent=11 // pred_check_branch
          %188 = sbr.rel (%p186) target = $region28
        $region27: #{tpu_custom_call.1} parent=11 // pred_region
          _
        $region28: #{tpu_custom_call.1} parent=11 // pred_fallthru
          _
      $region12: #{tpu_custom_call.1} parent=5 // pred_fallthru
        _
      %p189 = scmp.lt.s32.totalorder %s14, 2
      // Predicated region
      $region29: #{tpu_custom_call.1} parent=5 // pred_check
        %p190 = pneg %p189
      $region30: #{tpu_custom_call.1} parent=5 // pred_check_branch
        %192 = sbr.rel (%p190) target = $region32
      $region31: #{tpu_custom_call.1} parent=5 // pred_region
        // Predicated region
        $region33: #{tpu_custom_call.1} parent=31 // pred_check
          %p193 = pneg %p46
        $region34: #{tpu_custom_call.1} parent=31 // pred_check_branch
          %195 = sbr.rel (%p193) target = $region36
        $region35: #{tpu_custom_call.1} parent=31 // pred_region
          %p196 = scmp.lt.s32.totalorder %s21, 1
          %s197 = scalar_select %p196, %s21, 1
          %s198 = smul.addr %s197, 2
          %s199 = smul.addr %s198, 8
          %s200 = scalar_lea.vmem %s0, %s199
        $region36: #{tpu_custom_call.1} parent=31 // pred_fallthru
          _
      $region32: #{tpu_custom_call.1} parent=5 // pred_fallthru
        _
      %p201 = scmp.le.s32.totalorder 1, %s14
      %p202 = scmp.lt.s32.totalorder %s14, 3
      %p203 = pnand %p201, %p202
      %p204 = pneg %p203
      // Predicated region
      $region37: #{tpu_custom_call.1} parent=5 // pred_check
        _
      $region38: #{tpu_custom_call.1} parent=5 // pred_check_branch
        %206 = sbr.rel (%p203) target = $region40
      $region39: #{tpu_custom_call.1} parent=5 // pred_region
        %s207 = ssub.s32 %s14, 1
        %p208 = scmp.lt.s32.totalorder %s23, 1
        %s209 = scalar_select %p208, %s23, 1
        %s210 = smul.addr %s209, 2
        %s211 = smul.addr %s210, 8
        %s212 = scalar_lea.vmem %s0, %s211
        %p213 = pneg %p52
        %p214 = pneg %p49
        %p215 = pneg %p73
        %p216 = pneg %p70
        %p217 = pneg %p94
        %p218 = pneg %p91
        %p219 = pneg %p115
        %p220 = pneg %p112
        %p221 = pneg %p136
        %p222 = pneg %p133
        %p223 = pneg %p162
        %p224 = pneg %p159
        %s225 = sand.u32 %s149, 1
        %s226 = scalar_lea.sflag [#allocation5], %s225
        %s227 = sand.u32 %s149, 1
        %s228 = smul.addr %s227, 16
        %s229 = scalar_lea.vmem [#allocation4], %s228
        %p230 = scmp.lt.s32.totalorder %s23, 1
        %s231 = scalar_select %p230, %s23, 1
        %s232 = smul.addr %s231, 2
        %s233 = smul.addr %s232, 8
        %s234 = scalar_lea.vmem %s0, %s233
        %p236 = scmp.eq.s32.totalorder %s24, 0
        // Predicated region
        $region41: #{tpu_custom_call.1} parent=39 // pred_check
          %p237 = pneg %p236
        $region42: #{tpu_custom_call.1} parent=39 // pred_check_branch
          %239 = sbr.rel (%p237) target = $region44
        $region43: #{tpu_custom_call.1} parent=39 // pred_region
          %v240 = vld [vmem:[%s234] sm:$0xff]
          %v241 = vld [vmem:[%s234 + $0x8] sm:$0xff]
          %v242 = vpack.c.bf16 %v241, %v240
          %243 = vst [vmem:[#allocation2] sm:$0xff] %v242
          %244 = vst [vmem:[#allocation3] sm:$0xff] 0.0
          %245 = vst [vmem:[#allocation3 + $0x8] sm:$0xff] 0.0
        $region44: #{tpu_custom_call.1} parent=39 // pred_fallthru
          _
        %v246 = vld [vmem:[#allocation2] sm:$0xff]
        %s247 = smul.u32 %s24, 16
        %s248 = smul.addr %s247, 4
        %s249 = scalar_lea.vmem %s1, %s248
        %v250 = vld [vmem:[%s249] sm:$0xf]
        %v251 = vld [vmem:[%s249 + $0x4] sm:$0xf]
        %v252 = vld [vmem:[%s249 + $0x8] sm:$0xf]
        %v253 = vld [vmem:[%s249 + $0xc] sm:$0xf]
        %v254 = vld [vmem:[%s249 + $0x10] sm:$0xf]
        %v255 = vld [vmem:[%s249 + $0x14] sm:$0xf]
        %v256 = vld [vmem:[%s249 + $0x18] sm:$0xf]
        %v257 = vld [vmem:[%s249 + $0x1c] sm:$0xf]
        %v258 = vld [vmem:[%s249 + $0x20] sm:$0xf]
        %v259 = vld [vmem:[%s249 + $0x24] sm:$0xf]
        %v260 = vld [vmem:[%s249 + $0x28] sm:$0xf]
        %v261 = vld [vmem:[%s249 + $0x2c] sm:$0xf]
        %v262 = vld [vmem:[%s249 + $0x30] sm:$0xf]
        %v263 = vld [vmem:[%s249 + $0x34] sm:$0xf]
        %v264 = vld [vmem:[%s249 + $0x38] sm:$0xf]
        %v265 = vld [vmem:[%s249 + $0x3c] sm:$0xf]
        %s266 = scalar_lea.vmem %s2, %s24
        %v267 = vld [vmem:[%s266] sm:$0x1]
        %v269 = vlaneseq
        %v270 = vshrl.u32 %v269, 7
        %v271 = vsub.s32 0, %v270
        %v272 = vrot.slane %v267, %v271
        %v290 = vunpack.c.l.b16 %v250
        %v291 = vunpack.c.l.b16 %v251
        %v292 = vunpack.c.l.b16 %v252
        %v293 = vunpack.c.l.b16 %v253
        %v294 = vunpack.c.l.b16 %v254
        %v295 = vunpack.c.l.b16 %v255
        %v296 = vunpack.c.l.b16 %v256
        %v297 = vunpack.c.l.b16 %v257
        %v298 = vunpack.c.l.b16 %v258
        %v299 = vunpack.c.l.b16 %v259
        %v300 = vunpack.c.l.b16 %v260
        %v301 = vunpack.c.l.b16 %v261
        %v302 = vunpack.c.l.b16 %v262
        %v303 = vunpack.c.l.b16 %v263
        %v304 = vunpack.c.l.b16 %v264
        %v305 = vunpack.c.l.b16 %v265
        %v306 = vpack.c.b16 %v291, %v290
        %v307 = vpack.c.b16 %v293, %v292
        %v308 = vpack.c.b16 %v295, %v294
        %v309 = vpack.c.b16 %v297, %v296
        %v310 = vpack.c.b16 %v299, %v298
        %v311 = vpack.c.b16 %v301, %v300
        %v312 = vpack.c.b16 %v303, %v302
        %v313 = vpack.c.b16 %v305, %v304
        %322 = vmatprep.subr.bf16.mxu0 0
        %323 = vmatpush1.bf16.msra.mxu0 %v306
        %324 = vmatprep.subr.bf16.mxu0 0
        %325 = vmatpush1.bf16.msra.mxu0 %v307
        %326 = vmatprep.subr.bf16.mxu0 0
        %327 = vmatpush1.bf16.msra.mxu0 %v308
        %328 = vmatprep.subr.bf16.mxu0 0
        %329 = vmatpush1.bf16.msra.mxu0 %v309
        %330 = vmatprep.subr.bf16.mxu0 0
        %331 = vmatpush1.bf16.msra.mxu0 %v310
        %332 = vmatprep.subr.bf16.mxu0 0
        %333 = vmatpush1.bf16.msra.mxu0 %v311
        %334 = vmatprep.subr.bf16.mxu0 0
        %335 = vmatpush1.bf16.msra.mxu0 %v312
        %336 = vmatprep.subr.bf16.mxu0 0
        %337 = vmatpush1.bf16.msra.mxu0 %v313
        %338 = vmatprep.subr.bf16.mxu0 0
        %339 = vmatpush1.bf16.msra.mxu0 0
        %340 = vmatprep.subr.bf16.mxu0 0
        %341 = vmatpush1.bf16.msra.mxu0 0
        %342 = vmatprep.subr.bf16.mxu0 0
        %343 = vmatpush1.bf16.msra.mxu0 0
        %344 = vmatprep.subr.bf16.mxu0 0
        %345 = vmatpush1.bf16.msra.mxu0 0
        %346 = vmatprep.subr.bf16.mxu0 0
        %347 = vmatpush1.bf16.msra.mxu0 0
        %348 = vmatprep.subr.bf16.mxu0 0
        %349 = vmatpush1.bf16.msra.mxu0 0
        %350 = vmatprep.subr.bf16.mxu0 0
        %351 = vmatpush1.bf16.msra.mxu0 0
        %352 = vmatprep.subr.bf16.mxu0 0
        %353 = vmatpush1.bf16.msra.mxu0 0
        %354 = vmatprep.mubr.bf16.mxu0 0
        %355 = vmatmul.mubr.bf16.gmra.mrb[0].mxu0 %v246
        %v356 = vpop.f32.mrb[0].mxu0
        %v357 = vadd.f32 %v272, %v356
        %v358 = vpop.f32.mrb[0].mxu0
        %v359 = vpop.f32.mrb[0].mxu0
        %v360 = vadd.f32 %v272, %v359
        %v361 = vpop.f32.mrb[0].mxu0
        %362 = vdwg.mxu0
        %v363 = vpack.c.bf16 %v360, %v357
        %365 = vrot.lane.b32.xlu0 %v363, 96
        %v366 = vpop.permute.xlu0 %365
        %vm367 = vcmask 130048
        %v369 = vsel %vm367, %v363, 0
        %v372 = vsel %vm367, %v366, 0
        %374 = vmatprep.subr.bf16.mxu0 0
        %375 = vmatpush1.bf16.xpose.msra.mxu0 %v372
        %376 = vmatprep.subr.bf16.mxu0 0
        %377 = vmatpush1.bf16.xpose.msra.mxu0 0
        %378 = vmatprep.subr.bf16.mxu0 0
        %379 = vmatpush1.bf16.xpose.msra.mxu0 0
        %380 = vmatprep.subr.bf16.mxu0 0
        %381 = vmatpush1.bf16.xpose.msra.mxu0 0
        %382 = vmatprep.subr.bf16.mxu0 0
        %383 = vmatpush1.bf16.xpose.msra.mxu0 0
        %384 = vmatprep.subr.bf16.mxu0 0
        %385 = vmatpush1.bf16.xpose.msra.mxu0 0
        %386 = vmatprep.subr.bf16.mxu0 0
        %387 = vmatpush1.bf16.xpose.msra.mxu0 0
        %388 = vmatprep.subr.bf16.mxu0 0
        %389 = vmatpush1.bf16.xpose.msra.mxu0 0
        %390 = vmatprep.subr.bf16.mxu0 0
        %391 = vmatpush1.bf16.xpose.msra.mxu0 0
        %392 = vmatprep.subr.bf16.mxu0 0
        %393 = vmatpush1.bf16.xpose.msra.mxu0 0
        %394 = vmatprep.subr.bf16.mxu0 0
        %395 = vmatpush1.bf16.xpose.msra.mxu0 0
        %396 = vmatprep.subr.bf16.mxu0 0
        %397 = vmatpush1.bf16.xpose.msra.mxu0 0
        %398 = vmatprep.subr.bf16.mxu0 0
        %399 = vmatpush1.bf16.xpose.msra.mxu0 0
        %400 = vmatprep.subr.bf16.mxu0 0
        %401 = vmatpush1.bf16.xpose.msra.mxu0 0
        %402 = vmatprep.subr.bf16.mxu0 0
        %403 = vmatpush1.bf16.xpose.msra.mxu0 0
        %404 = vmatprep.subr.bf16.mxu0 0
        %405 = vmatpush1.bf16.xpose.msra.mxu0 0
        %406 = vmatprep.mubr.bf16.mxu0 0
        %407 = vmatmul.mubr.bf16.gmra.mrb[0].mxu0 %v369
        %v408 = vpop.f32.mrb[0].mxu0
        %v409 = vadd.f32 0.0, %v408
        %v410 = vpop.f32.mrb[0].mxu0
        %v411 = vpop.f32.mrb[0].mxu0
        %v412 = vadd.f32 0.0, %v411
        %v413 = vpop.f32.mrb[0].mxu0
        %414 = vdwg.mxu0
        %v415 = vsel %vm367, %v409, -inf
        %416 = vmax.xlane.f32.xlu0 %v415
        %v417 = vpop.xlane.xlu0 %416
        %v418 = vsel %vm367, %v412, -inf
        %419 = vmax.xlane.f32.xlu0 %v418
        %v420 = vpop.xlane.xlu0 %419
        %v421 = vsub.f32 %v409, %v417
        %v422 = vsub.f32 %v412, %v420
        %v423 = vmul.f32 %v421, 1.442695
        %v424 = vpow.pop %v423
        %v425 = vmul.f32 %v422, 1.442695
        %v426 = vpow.pop %v425
        %v427 = vsel %vm367, %v424, 0.0
        %428 = vadd.xlane.f32.xlu0 %v427
        %v429 = vpop.xlane.xlu0 %428
        %v430 = vsel %vm367, %v426, 0.0
        %431 = vadd.xlane.f32.xlu0 %v430
        %v432 = vpop.xlane.xlu0 %431
        %v433 = vpack.c.bf16 %v426, %v424
        %434 = vrot.lane.b32.xlu0 %v363, 64
        %v435 = vpop.permute.xlu0 %434
        %v438 = vsel %vm367, %v433, 0
        %440 = vmatprep.subr.bf16.mxu0 0
        %441 = vmatpush1.bf16.msra.mxu0 %v435
        %442 = vmatprep.subr.bf16.mxu0 0
        %443 = vmatpush1.bf16.msra.mxu0 0
        %444 = vmatprep.subr.bf16.mxu0 0
        %445 = vmatpush1.bf16.msra.mxu0 0
        %446 = vmatprep.subr.bf16.mxu0 0
        %447 = vmatpush1.bf16.msra.mxu0 0
        %448 = vmatprep.subr.bf16.mxu0 0
        %449 = vmatpush1.bf16.msra.mxu0 0
        %450 = vmatprep.subr.bf16.mxu0 0
        %451 = vmatpush1.bf16.msra.mxu0 0
        %452 = vmatprep.subr.bf16.mxu0 0
        %453 = vmatpush1.bf16.msra.mxu0 0
        %454 = vmatprep.subr.bf16.mxu0 0
        %455 = vmatpush1.bf16.msra.mxu0 0
        %456 = vmatprep.subr.bf16.mxu0 0
        %457 = vmatpush1.bf16.msra.mxu0 0
        %458 = vmatprep.subr.bf16.mxu0 0
        %459 = vmatpush1.bf16.msra.mxu0 0
        %460 = vmatprep.subr.bf16.mxu0 0
        %461 = vmatpush1.bf16.msra.mxu0 0
        %462 = vmatprep.subr.bf16.mxu0 0
        %463 = vmatpush1.bf16.msra.mxu0 0
        %464 = vmatprep.subr.bf16.mxu0 0
        %465 = vmatpush1.bf16.msra.mxu0 0
        %466 = vmatprep.subr.bf16.mxu0 0
        %467 = vmatpush1.bf16.msra.mxu0 0
        %468 = vmatprep.subr.bf16.mxu0 0
        %469 = vmatpush1.bf16.msra.mxu0 0
        %470 = vmatprep.subr.bf16.mxu0 0
        %471 = vmatpush1.bf16.msra.mxu0 0
        %472 = vmatprep.mubr.bf16.mxu0 0
        %473 = vmatmul.mubr.bf16.gmra.mrb[0].mxu0 %v438
        %v474 = vpop.f32.mrb[0].mxu0
        %v475 = vadd.f32 0.0, %v474
        %v476 = vpop.f32.mrb[0].mxu0
        %v477 = vpop.f32.mrb[0].mxu0
        %v478 = vadd.f32 0.0, %v477
        %v479 = vpop.f32.mrb[0].mxu0
        %480 = vdwg.mxu0
        %v481 = vrcp.pop %v429
        %v482 = vrcp.pop %v432
        %v483 = vmul.f32 %v475, %v481
        %v484 = vmul.f32 %v478, %v482
        %485 = vrot.lane.b32.xlu0 %v363, 112
        %v486 = vpop.permute.xlu0 %485
        %487 = vrot.lane.b32.xlu0 %v363, 80
        %v488 = vpop.permute.xlu0 %487
        %v490 = vsel %vm367, %v486, 0
        %v493 = vsel %vm367, %v488, 0
        %495 = vmatprep.subr.bf16.mxu0 0
        %496 = vmatpush1.bf16.xpose.msra.mxu0 %v493
        %497 = vmatprep.subr.bf16.mxu0 0
        %498 = vmatpush1.bf16.xpose.msra.mxu0 0
        %499 = vmatprep.subr.bf16.mxu0 0
        %500 = vmatpush1.bf16.xpose.msra.mxu0 0
        %501 = vmatprep.subr.bf16.mxu0 0
        %502 = vmatpush1.bf16.xpose.msra.mxu0 0
        %503 = vmatprep.subr.bf16.mxu0 0
        %504 = vmatpush1.bf16.xpose.msra.mxu0 0
        %505 = vmatprep.subr.bf16.mxu0 0
        %506 = vmatpush1.bf16.xpose.msra.mxu0 0
        %507 = vmatprep.subr.bf16.mxu0 0
        %508 = vmatpush1.bf16.xpose.msra.mxu0 0
        %509 = vmatprep.subr.bf16.mxu0 0
        %510 = vmatpush1.bf16.xpose.msra.mxu0 0
        %511 = vmatprep.subr.bf16.mxu0 0
        %512 = vmatpush1.bf16.xpose.msra.mxu0 0
        %513 = vmatprep.subr.bf16.mxu0 0
        %514 = vmatpush1.bf16.xpose.msra.mxu0 0
        %515 = vmatprep.subr.bf16.mxu0 0
        %516 = vmatpush1.bf16.xpose.msra.mxu0 0
        %517 = vmatprep.subr.bf16.mxu0 0
        %518 = vmatpush1.bf16.xpose.msra.mxu0 0
        %519 = vmatprep.subr.bf16.mxu0 0
        %520 = vmatpush1.bf16.xpose.msra.mxu0 0
        %521 = vmatprep.subr.bf16.mxu0 0
        %522 = vmatpush1.bf16.xpose.msra.mxu0 0
        %523 = vmatprep.subr.bf16.mxu0 0
        %524 = vmatpush1.bf16.xpose.msra.mxu0 0
        %525 = vmatprep.subr.bf16.mxu0 0
        %526 = vmatpush1.bf16.xpose.msra.mxu0 0
        %527 = vmatprep.mubr.bf16.mxu0 0
        %528 = vmatmul.mubr.bf16.gmra.mrb[0].mxu0 %v490
        %v529 = vpop.f32.mrb[0].mxu0
        %v530 = vadd.f32 0.0, %v529
        %v531 = vpop.f32.mrb[0].mxu0
        %v532 = vpop.f32.mrb[0].mxu0
        %v533 = vadd.f32 0.0, %v532
        %v534 = vpop.f32.mrb[0].mxu0
        %535 = vdwg.mxu0
        %v536 = vsel %vm367, %v530, -inf
        %537 = vmax.xlane.f32.xlu0 %v536
        %v538 = vpop.xlane.xlu0 %537
        %v539 = vsel %vm367, %v533, -inf
        %540 = vmax.xlane.f32.xlu0 %v539
        %v541 = vpop.xlane.xlu0 %540
        %v542 = vsub.f32 %v530, %v538
        %v543 = vsub.f32 %v533, %v541
        %v544 = vmul.f32 %v542, 1.442695
        %v545 = vpow.pop %v544
        %v546 = vmul.f32 %v543, 1.442695
        %v547 = vpow.pop %v546
        %v548 = vsel %vm367, %v545, 0.0
        %549 = vadd.xlane.f32.xlu0 %v548
        %v550 = vpop.xlane.xlu0 %549
        %v551 = vsel %vm367, %v547, 0.0
        %552 = vadd.xlane.f32.xlu0 %v551
        %v553 = vpop.xlane.xlu0 %552
        %v554 = vpack.c.bf16 %v547, %v545
        %555 = vrot.lane.b32.xlu0 %v363, 48
        %v556 = vpop.permute.xlu0 %555
        %v559 = vsel %vm367, %v554, 0
        %561 = vmatprep.subr.bf16.mxu0 0
        %562 = vmatpush1.bf16.msra.mxu0 %v556
        %563 = vmatprep.subr.bf16.mxu0 0
        %564 = vmatpush1.bf16.msra.mxu0 0
        %565 = vmatprep.subr.bf16.mxu0 0
        %566 = vmatpush1.bf16.msra.mxu0 0
        %567 = vmatprep.subr.bf16.mxu0 0
        %568 = vmatpush1.bf16.msra.mxu0 0
        %569 = vmatprep.subr.bf16.mxu0 0
        %570 = vmatpush1.bf16.msra.mxu0 0
        %571 = vmatprep.subr.bf16.mxu0 0
        %572 = vmatpush1.bf16.msra.mxu0 0
        %573 = vmatprep.subr.bf16.mxu0 0
        %574 = vmatpush1.bf16.msra.mxu0 0
        %575 = vmatprep.subr.bf16.mxu0 0
        %576 = vmatpush1.bf16.msra.mxu0 0
        %577 = vmatprep.subr.bf16.mxu0 0
        %578 = vmatpush1.bf16.msra.mxu0 0
        %579 = vmatprep.subr.bf16.mxu0 0
        %580 = vmatpush1.bf16.msra.mxu0 0
        %581 = vmatprep.subr.bf16.mxu0 0
        %582 = vmatpush1.bf16.msra.mxu0 0
        %583 = vmatprep.subr.bf16.mxu0 0
        %584 = vmatpush1.bf16.msra.mxu0 0
        %585 = vmatprep.subr.bf16.mxu0 0
        %586 = vmatpush1.bf16.msra.mxu0 0
        %587 = vmatprep.subr.bf16.mxu0 0
        %588 = vmatpush1.bf16.msra.mxu0 0
        %589 = vmatprep.subr.bf16.mxu0 0
        %590 = vmatpush1.bf16.msra.mxu0 0
        %591 = vmatprep.subr.bf16.mxu0 0
        %592 = vmatpush1.bf16.msra.mxu0 0
        %593 = vmatprep.mubr.bf16.mxu0 0
        %594 = vmatmul.mubr.bf16.gmra.mrb[0].mxu0 %v559
        %v595 = vpop.f32.mrb[0].mxu0
        %v596 = vadd.f32 0.0, %v595
        %v597 = vpop.f32.mrb[0].mxu0
        %v598 = vpop.f32.mrb[0].mxu0
        %v599 = vadd.f32 0.0, %v598
        %v600 = vpop.f32.mrb[0].mxu0
        %601 = vdwg.mxu0
        %v602 = vrcp.pop %v550
        %v603 = vrcp.pop %v553
        %v604 = vmul.f32 %v596, %v602
        %v605 = vmul.f32 %v599, %v603
        %608 = vrot.lane.b32.xlu0 %v604, 16
        %v609 = vpop.permute.xlu0 %608
        %610 = vrot.lane.b32.xlu0 %v605, 16
        %v611 = vpop.permute.xlu0 %610
        %v614 = vsel %vm367, %v483, %v609
        %v615 = vsel %vm367, %v484, %v611
        %v616 = vpack.c.bf16 %v615, %v614
        %v617 = vld [vmem:[#allocation3] sm:$0xff]
        %v618 = vld [vmem:[#allocation3 + $0x8] sm:$0xff]
        %s619 = smul.u32 %s24, 4
        %s620 = smul.addr %s619, 4
        %s621 = scalar_lea.vmem %s3, %s620
        %v622 = vld [vmem:[%s621] sm:$0xf]
        %v623 = vld [vmem:[%s621 + $0x4] sm:$0xf]
        %v624 = vld [vmem:[%s621 + $0x8] sm:$0xf]
        %v625 = vld [vmem:[%s621 + $0xc] sm:$0xf]
        %v630 = vunpack.c.l.b16 %v622
        %v631 = vunpack.c.l.b16 %v623
        %v632 = vunpack.c.l.b16 %v624
        %v633 = vunpack.c.l.b16 %v625
        %v634 = vpack.c.b16 %v631, %v630
        %v635 = vpack.c.b16 %v633, %v632
        %vm638 = vcmask 261120
        %v640 = vsel %vm638, %v616, 0
        %642 = vmatprep.subr.bf16.mxu0 0
        %643 = vmatpush1.bf16.msra.mxu0 %v634
        %644 = vmatprep.subr.bf16.mxu0 0
        %645 = vmatpush1.bf16.msra.mxu0 %v635
        %646 = vmatprep.subr.bf16.mxu0 0
        %647 = vmatpush1.bf16.msra.mxu0 0
        %648 = vmatprep.subr.bf16.mxu0 0
        %649 = vmatpush1.bf16.msra.mxu0 0
        %650 = vmatprep.subr.bf16.mxu0 0
        %651 = vmatpush1.bf16.msra.mxu0 0
        %652 = vmatprep.subr.bf16.mxu0 0
        %653 = vmatpush1.bf16.msra.mxu0 0
        %654 = vmatprep.subr.bf16.mxu0 0
        %655 = vmatpush1.bf16.msra.mxu0 0
        %656 = vmatprep.subr.bf16.mxu0 0
        %657 = vmatpush1.bf16.msra.mxu0 0
        %658 = vmatprep.subr.bf16.mxu0 0
        %659 = vmatpush1.bf16.msra.mxu0 0
        %660 = vmatprep.subr.bf16.mxu0 0
        %661 = vmatpush1.bf16.msra.mxu0 0
        %662 = vmatprep.subr.bf16.mxu0 0
        %663 = vmatpush1.bf16.msra.mxu0 0
        %664 = vmatprep.subr.bf16.mxu0 0
        %665 = vmatpush1.bf16.msra.mxu0 0
        %666 = vmatprep.subr.bf16.mxu0 0
        %667 = vmatpush1.bf16.msra.mxu0 0
        %668 = vmatprep.subr.bf16.mxu0 0
        %669 = vmatpush1.bf16.msra.mxu0 0
        %670 = vmatprep.subr.bf16.mxu0 0
        %671 = vmatpush1.bf16.msra.mxu0 0
        %672 = vmatprep.subr.bf16.mxu0 0
        %673 = vmatpush1.bf16.msra.mxu0 0
        %674 = vmatprep.mubr.bf16.mxu0 0
        %675 = vmatmul.mubr.bf16.gmra.mrb[0].mxu0 %v640
        %v676 = vpop.f32.mrb[0].mxu0
        %v677 = vadd.f32 0.0, %v676
        %v678 = vpop.f32.mrb[0].mxu0
        %v679 = vpop.f32.mrb[0].mxu0
        %v680 = vadd.f32 0.0, %v679
        %v681 = vpop.f32.mrb[0].mxu0
        %682 = vdwg.mxu0
        %v683 = vadd.f32 %v617, %v677
        %v684 = vadd.f32 %v618, %v680
        %685 = vst [vmem:[#allocation3] sm:$0xff] %v683
        %686 = vst [vmem:[#allocation3 + $0x8] sm:$0xff] %v684
        // Predicated region
        $region45: #{tpu_custom_call.1} parent=39 // pred_check
          %p687 = pneg %p236
        $region46: #{tpu_custom_call.1} parent=39 // pred_check_branch
          %689 = sbr.rel (%p687) target = $region48
        $region47: #{tpu_custom_call.1} parent=39 // pred_region
          %v690 = vld [vmem:[#allocation3] sm:$0xff]
          %v691 = vld [vmem:[#allocation3 + $0x8] sm:$0xff]
          %v692 = vld [vmem:[%s4] sm:$0x1]
          %v694 = vlaneseq
          %v695 = vshrl.u32 %v694, 7
          %v696 = vsub.s32 0, %v695
          %v697 = vrot.slane %v692, %v696
          %v699 = vadd.f32 %v690, %v697
          %v700 = vadd.f32 %v691, %v697
          %701 = vst [vmem:[%s229] sm:$0xff] %v699
          %702 = vst [vmem:[%s229 + $0x8] sm:$0xff] %v700
        $region48: #{tpu_custom_call.1} parent=39 // pred_fallthru
          _
        %s703 = sand.u32 %s149, 1
        %s704 = scalar_lea.sflag [#allocation5], %s703
        %s705 = sand.u32 %s149, 1
        %s706 = smul.addr %s705, 16
        %s707 = scalar_lea.vmem [#allocation4], %s706
        // Predicated region
        $region49: #{tpu_custom_call.1} parent=39 // pred_check
          %p708 = pneg %p159
        $region50: #{tpu_custom_call.1} parent=39 // pred_check_branch
          %710 = sbr.rel (%p708) target = $region52
        $region51: #{tpu_custom_call.1} parent=39 // pred_region
          %s712 = ssub.s32 256, 256
          %713 = vsyncadd %s704, %s712
          %s714 = smul.addr %s23, 2
          %s715 = smul.addr %s714, 128
          %s716 = scalar_lea.hbm %s5, %s715
          %s717 = sshll.u32 %s707, 4
          %s718 = int_to_ptr.vmem [resolvable:$true] %s717
          %723 = dma.vmem_to_hbm [thread:$0]  %s718, 256, %s716, %s704, 128, 128, 8
        $region52: #{tpu_custom_call.1} parent=39 // pred_fallthru
          _
      $region40: #{tpu_custom_call.1} parent=5 // pred_fallthru
        _
      %p724 = scmp.le.s32.totalorder 2, %s14
      // Predicated region
      $region53: #{tpu_custom_call.1} parent=5 // pred_check
        %p725 = pneg %p724
      $region54: #{tpu_custom_call.1} parent=5 // pred_check_branch
        %727 = sbr.rel (%p725) target = $region56
      $region55: #{tpu_custom_call.1} parent=5 // pred_region
        %s728 = ssub.s32 %s14, 2
        // Predicated region
        $region57: #{tpu_custom_call.1} parent=55 // pred_check
          %p729 = pneg %p165
        $region58: #{tpu_custom_call.1} parent=55 // pred_check_branch
          %731 = sbr.rel (%p729) target = $region60
        $region59: #{tpu_custom_call.1} parent=55 // pred_region
          %s732 = sand.u32 %s150, 1
          %s733 = scalar_lea.sflag [#allocation5], %s732
          %s734 = sand.u32 %s150, 1
          %s735 = smul.addr %s734, 16
          %s736 = scalar_lea.vmem [#allocation4], %s735
          %737 = dma.done %s733, 256
        $region60: #{tpu_custom_call.1} parent=55 // pred_fallthru
          _
      $region56: #{tpu_custom_call.1} parent=5 // pred_fallthru
        _
    $region6: #{tpu_custom_call.1} parent=1 // loop_footer
      %s18 = sadd.s32 1, %s14
    $region7: #{tpu_custom_call.1} parent=1 // loop_footer_branch
      %13 = sbr.rel target = $region3
    $region8: #{tpu_custom_call.1} parent=1 // loop_exit
      _
    %738 = vsyncpa [#allocation5], 1
    %s739 = scalar_lea.sflag [#allocation5], 1
    %740 = vsyncpa %s739, 1

</llo_original>
